<compile_context>
chip_gen: v7x
topology: tpu7x:2x2x1
jax: 0.10.0
libtpu: 0.0.40
codegen_flags: <defaults>
</compile_context>

<pallas_src>
import math
from functools import partial

import jax
import jax.numpy as jnp
import numpy as np
from jax.experimental import pallas as pl
from jax.experimental.pallas import tpu as pltpu

CURVATURE = 1.0  # Poincare ball curvature c used by manifold.logmap0
# TODO(synk): clip epsilons (1e-15 / 1e-5) mirror a typical geoopt f32 eps; if
# bitwise parity near the ball boundary is needed, match geoopt's exact eps.


def _round_up(x, m):
    return ((x + m - 1) // m) * m


def _dec_wrapped_kernel(num_hidden_layers, z_ref, *refs):
    """refs = (w0, b0, ..., w_fc31, b_fc31, mu_ref, h_scratch)."""
    *wrefs, mu_ref, h_ref = refs

    # The hidden stack depends only on the batch tile (grid axis 0); compute it
    # once per batch tile (first output-column step) and cache it in VMEM.
    @pl.when(pl.program_id(1) == 0)
    def _():
        z = z_ref[...]                                   # f32 (TB, D)

        # ---- manifold.logmap0 (Poincare ball), f32 throughout:
        #   logmap0(z) = artanh(sqrt(c) * ||z||) * z / (sqrt(c) * ||z||)
        sqrt_c = jnp.float32(math.sqrt(CURVATURE))
        norm = jnp.sqrt(jnp.maximum(jnp.sum(z * z, axis=-1, keepdims=True),
                                    1e-15))
        u = jnp.clip(sqrt_c * norm, 1e-15, 1.0 - 1e-5)
        artanh = 0.5 * jnp.log((1.0 + u) / (1.0 - u))    # atanh via log (EUP)
        inv = pl.reciprocal(sqrt_c * norm, approx=True)  # EUP slot, VALU-free
        h = z * (artanh * inv)

        # ---- hidden MLP stack: Linear + ReLU (bf16 matmul, f32 accumulate)
        for l in range(num_hidden_layers):
            w = wrefs[2 * l][...]                        # bf16 (Kp, Hp)
            b = wrefs[2 * l + 1][...]                    # f32  (1, Hp)
            h = jnp.maximum(
                jnp.dot(h.astype(w.dtype), w,
                        preferred_element_type=jnp.float32) + b, 0.0)
        h_ref[...] = h

    # ---- fc31: one output-column tile per grid step
    w = wrefs[2 * num_hidden_layers][...]                # bf16 (Hp, TN)
    b = wrefs[2 * num_hidden_layers + 1][...]            # f32  (1, TN)
    h = h_ref[...]
    mu_ref[...] = jnp.dot(h.astype(w.dtype), w,
                          preferred_element_type=jnp.float32) + b


def dec_wrapped_forward(z, params, data_size, *, weight_dtype=jnp.bfloat16):
    """params: list of (W:(in,out), b:(out,)) — hidden layers then fc31."""
    B, D = z.shape
    n_hidden = len(params) - 1
    hidden_dim = params[0][0].shape[1]
    out_dim = params[-1][0].shape[1]

    # Padded, MXU/lane-friendly feature dims.
    Hp = _round_up(hidden_dim, 128)
    OutP = _round_up(out_dim, 128)
    TN = min(OutP, 1024)                 # fc31 output-column tile (lanes)
    OutP = _round_up(OutP, TN)
    n_out = OutP // TN

    # Batch tiling (multiple of 8 sublanes; 256 rows once the batch is large).
    TB = 256 if B >= 256 else _round_up(max(B, 1), 8)
    Bp = _round_up(B, TB)
    n_b = Bp // TB

    zp = z.astype(jnp.float32)
    if Bp != B:
        zp = jnp.pad(zp, ((0, Bp - B), (0, 0)))

    w_itemsize = jnp.dtype(weight_dtype).itemsize
    flat = []
    in_specs = [pl.BlockSpec((TB, D), lambda i, j: (i, 0))]
    blk_bytes = TB * D * 4               # z tile
    for li, (w, b) in enumerate(params):
        last = li == n_hidden
        in_p = D if li == 0 else Hp
        out_p = OutP if last else Hp
        wp = jnp.zeros((in_p, out_p), weight_dtype)
        wp = wp.at[: w.shape[0], : w.shape[1]].set(w.astype(weight_dtype))
        bp = jnp.zeros((1, out_p), jnp.float32)
        bp = bp.at[0, : b.shape[0]].set(b.astype(jnp.float32))
        flat += [wp, bp]
        if last:
            # fc31 streamed per output-column tile.
            in_specs += [pl.BlockSpec((Hp, TN), lambda i, j: (0, j)),
                         pl.BlockSpec((1, TN), lambda i, j: (0, j))]
            blk_bytes += Hp * TN * w_itemsize + TN * 4
        else:
            # Hidden-layer weights stay VMEM-resident across the whole grid.
            in_specs += [pl.BlockSpec((in_p, out_p), lambda i, j: (0, 0)),
                         pl.BlockSpec((1, out_p), lambda i, j: (0, 0))]
            blk_bytes += in_p * out_p * w_itemsize + out_p * 4
    blk_bytes += TB * TN * 4             # mu tile
    scratch_bytes = TB * Hp * 4

    # Double-buffered blocks + scratch + headroom, capped to v7x's 64 MiB.
    need = 2 * blk_bytes + scratch_bytes
    vmem_limit = int(min(max(2 * need + (2 << 20), 16 << 20), 64 << 20))

    mu_flat = pl.pallas_call(
        partial(_dec_wrapped_kernel, n_hidden),
        out_shape=jax.ShapeDtypeStruct((Bp, OutP), jnp.float32),
        grid=(n_b, n_out),
        in_specs=in_specs,
        out_specs=pl.BlockSpec((TB, TN), lambda i, j: (i, j)),
        scratch_shapes=[pltpu.VMEM((TB, Hp), jnp.float32)],
        compiler_params=pltpu.CompilerParams(
            dimension_semantics=("parallel", "arbitrary"),
            vmem_limit_bytes=vmem_limit),
    )(zp, *flat)

    mu = mu_flat[:B, :out_dim].reshape(z.shape[:-1] + tuple(data_size))
    return mu, jnp.ones_like(mu)


# ----------------------- pure-JAX reference (for checking) -----------------------
def _reference_forward(z, params, data_size, weight_dtype=jnp.bfloat16):
    sqrt_c = math.sqrt(CURVATURE)
    norm = jnp.sqrt(jnp.maximum(jnp.sum(z * z, axis=-1, keepdims=True), 1e-15))
    u = jnp.clip(sqrt_c * norm, 1e-15, 1.0 - 1e-5)
    artanh = 0.5 * jnp.log((1.0 + u) / (1.0 - u))
    h = z * (artanh / (sqrt_c * norm))
    for w, b in params[:-1]:
        h = jnp.maximum(
            jnp.dot(h.astype(weight_dtype), w.astype(weight_dtype),
                    preferred_element_type=jnp.float32) + b, 0.0)
    w, b = params[-1]
    mu = (jnp.dot(h.astype(weight_dtype), w.astype(weight_dtype),
                  preferred_element_type=jnp.float32) + b)
    mu = mu.reshape(z.shape[:-1] + tuple(data_size))
    return mu, jnp.ones_like(mu)


def _init_linear(key, fan_in, fan_out):
    # deterministic PyTorch-style uniform(-1/sqrt(fan_in), 1/sqrt(fan_in))
    kw, kb = jax.random.split(key)
    bound = 1.0 / math.sqrt(fan_in)
    w = jax.random.uniform(kw, (fan_in, fan_out), jnp.float32, -bound, bound)
    b = jax.random.uniform(kb, (fan_out,), jnp.float32, -bound, bound)
    return w, b


if __name__ == "__main__":
    # Small shapes consistent with the module:
    B = 8                     # batch
    coord_dim = 16            # manifold.coord_dim (latent dim)
    hidden_dim = 32
    num_hidden_layers = 2     # -> Linear(D,H)+ReLU, Linear(H,H)+ReLU
    data_size = (1, 8, 8)     # prod = 64

    key = jax.random.PRNGKey(0)
    kz, k0, k1, k2 = jax.random.split(key, 4)

    # z inside the unit Poincare ball
    z = jax.random.uniform(kz, (B, coord_dim), jnp.float32, -0.1, 0.1)

    params = []
    params.append(_init_linear(k0, coord_dim, hidden_dim))               # hidden 0
    params.append(_init_linear(k1, hidden_dim, hidden_dim))              # hidden 1
    params.append(_init_linear(k2, hidden_dim, int(np.prod(data_size)))) # fc31

    mu, sigma = dec_wrapped_forward(z, params, data_size)
    jax.block_until_ready((mu, sigma))

    mu_ref, sigma_ref = _reference_forward(z, params, data_size)
    assert mu.shape == (B,) + data_size, mu.shape
    assert sigma.shape == mu.shape
    np.testing.assert_allclose(np.asarray(mu), np.asarray(mu_ref),
                               rtol=2e-2, atol=2e-2)
    np.testing.assert_allclose(np.asarray(sigma),
                               np.ones_like(np.asarray(mu)))

    print("KERNEL_OK")
</pallas_src>

<mosaic_0001>
module attributes {stable_mosaic.version = 11 : i64} {
  func.func @_dec_wrapped_kernel(%arg0: i32, %arg1: i32, %arg2: memref<8x16xf32, #tpu.memory_space<vmem>>, %arg3: memref<16x128xbf16, #tpu.memory_space<vmem>>, %arg4: memref<1x128xf32, #tpu.memory_space<vmem>>, %arg5: memref<128x128xbf16, #tpu.memory_space<vmem>>, %arg6: memref<1x128xf32, #tpu.memory_space<vmem>>, %arg7: memref<128x128xbf16, #tpu.memory_space<vmem>>, %arg8: memref<1x128xf32, #tpu.memory_space<vmem>>, %arg9: memref<8x128xf32, #tpu.memory_space<vmem>>, %arg10: memref<8x128xf32, #tpu.memory_space<vmem>>) attributes {dimension_semantics = [#tpu.dimension_semantics<parallel>, #tpu.dimension_semantics<arbitrary>], iteration_bounds = array<i64: 1, 1>, scalar_prefetch = 0 : i64, scratch_operands = 1 : i64, tpu.core_type = #tpu.core_type<tc>, window_params = [{transform_indices = @transform_0, window_bounds = array<i64: 8, 16>}, {pipeline_mode = #tpu.pipeline_mode<synchronous>, transform_indices = @transform_1, window_bounds = array<i64: 16, 128>}, {pipeline_mode = #tpu.pipeline_mode<synchronous>, transform_indices = @transform_2, window_bounds = array<i64: 1, 128>}, {pipeline_mode = #tpu.pipeline_mode<synchronous>, transform_indices = @transform_3, window_bounds = array<i64: 128, 128>}, {pipeline_mode = #tpu.pipeline_mode<synchronous>, transform_indices = @transform_4, window_bounds = array<i64: 1, 128>}, {transform_indices = @transform_5, window_bounds = array<i64: 128, 128>}, {transform_indices = @transform_6, window_bounds = array<i64: 1, 128>}, {transform_indices = @transform_7, window_bounds = array<i64: 8, 128>}]} {
    %c0_i32 = arith.constant 0 : i32
    %0 = arith.cmpi eq, %arg1, %c0_i32 : i32
    %1 = arith.extui %0 : i1 to i32
    %c0_i32_0 = arith.constant 0 : i32
    %2 = arith.cmpi ne, %1, %c0_i32_0 : i32
    scf.if %2 {
      %c0_8 = arith.constant 0 : index
      %c0_9 = arith.constant 0 : index
      %11 = vector.load %arg2[%c0_8, %c0_9] : memref<8x16xf32, #tpu.memory_space<vmem>>, vector<8x16xf32>
      %12 = arith.mulf %11, %11 : vector<8x16xf32>
      %cst_10 = arith.constant dense<0.000000e+00> : vector<8xf32>
      %13 = vector.multi_reduction <add>, %12, %cst_10 [1] : vector<8x16xf32> to vector<8xf32>
      %14 = vector.shape_cast %13 : vector<8xf32> to vector<8x1xf32>
      %cst_11 = arith.constant 1.000000e-15 : f32
      %15 = vector.broadcast %cst_11 : f32 to vector<8x1xf32>
      %16 = arith.maximumf %14, %15 : vector<8x1xf32>
      %17 = math.sqrt %16 : vector<8x1xf32>
      %cst_12 = arith.constant 1.000000e+00 : f32
      %18 = vector.broadcast %cst_12 : f32 to vector<8x1xf32>
      %19 = arith.mulf %18, %17 : vector<8x1xf32>
      %cst_13 = arith.constant 1.000000e-15 : f32
      %cst_14 = arith.constant 0.999989986 : f32
      %20 = vector.broadcast %cst_13 : f32 to vector<8x1xf32>
      %21 = arith.maximumf %20, %19 : vector<8x1xf32>
      %22 = vector.broadcast %cst_14 : f32 to vector<8x1xf32>
      %23 = arith.minimumf %22, %21 : vector<8x1xf32>
      %cst_15 = arith.constant 1.000000e+00 : f32
      %24 = vector.broadcast %cst_15 : f32 to vector<8x1xf32>
      %25 = arith.addf %24, %23 : vector<8x1xf32>
      %cst_16 = arith.constant 1.000000e+00 : f32
      %26 = vector.broadcast %cst_16 : f32 to vector<8x1xf32>
      %27 = arith.subf %26, %23 : vector<8x1xf32>
      %28 = arith.divf %25, %27 : vector<8x1xf32>
      %29 = math.log %28 : vector<8x1xf32>
      %cst_17 = arith.constant 5.000000e-01 : f32
      %30 = vector.broadcast %cst_17 : f32 to vector<8x1xf32>
      %31 = arith.mulf %30, %29 : vector<8x1xf32>
      %cst_18 = arith.constant 1.000000e+00 : f32
      %32 = vector.broadcast %cst_18 : f32 to vector<8x1xf32>
      %33 = arith.mulf %32, %17 : vector<8x1xf32>
      %34 = tpu.reciprocal %33 {approx = true} : vector<8x1xf32> -> vector<8x1xf32>
      %35 = arith.mulf %31, %34 : vector<8x1xf32>
      %36 = vector.broadcast %35 : vector<8x1xf32> to vector<8x16xf32>
      %37 = arith.mulf %11, %36 : vector<8x16xf32>
      %c0_19 = arith.constant 0 : index
      %c0_20 = arith.constant 0 : index
      %38 = vector.load %arg3[%c0_19, %c0_20] : memref<16x128xbf16, #tpu.memory_space<vmem>>, vector<16x128xbf16>
      %c0_21 = arith.constant 0 : index
      %c0_22 = arith.constant 0 : index
      %39 = vector.load %arg4[%c0_21, %c0_22] : memref<1x128xf32, #tpu.memory_space<vmem>>, vector<1x128xf32>
      %40 = arith.truncf %37 : vector<8x16xf32> to vector<8x16xbf16>
      %cst_23 = arith.constant dense<0.000000e+00> : vector<8x128xf32>
      %41 = tpu.matmul %40, %38, %cst_23 {dimension_numbers = #tpu.dot_dimension_numbers<[1], [0], [0], [1], [0, 0, 1, 1], [], []>} : vector<8x16xbf16>, vector<16x128xbf16>, vector<8x128xf32> -> vector<8x128xf32>
      %42 = vector.broadcast %39 : vector<1x128xf32> to vector<8x128xf32>
      %43 = arith.addf %41, %42 : vector<8x128xf32>
      %cst_24 = arith.constant 0.000000e+00 : f32
      %44 = vector.broadcast %cst_24 : f32 to vector<8x128xf32>
      %45 = arith.maximumf %43, %44 : vector<8x128xf32>
      %c0_25 = arith.constant 0 : index
      %c0_26 = arith.constant 0 : index
      %46 = vector.load %arg5[%c0_25, %c0_26] : memref<128x128xbf16, #tpu.memory_space<vmem>>, vector<128x128xbf16>
      %c0_27 = arith.constant 0 : index
      %c0_28 = arith.constant 0 : index
      %47 = vector.load %arg6[%c0_27, %c0_28] : memref<1x128xf32, #tpu.memory_space<vmem>>, vector<1x128xf32>
      %48 = arith.truncf %45 : vector<8x128xf32> to vector<8x128xbf16>
      %cst_29 = arith.constant dense<0.000000e+00> : vector<8x128xf32>
      %49 = tpu.matmul %48, %46, %cst_29 {dimension_numbers = #tpu.dot_dimension_numbers<[1], [0], [0], [1], [0, 0, 1, 1], [], []>} : vector<8x128xbf16>, vector<128x128xbf16>, vector<8x128xf32> -> vector<8x128xf32>
      %50 = vector.broadcast %47 : vector<1x128xf32> to vector<8x128xf32>
      %51 = arith.addf %49, %50 : vector<8x128xf32>
      %cst_30 = arith.constant 0.000000e+00 : f32
      %52 = vector.broadcast %cst_30 : f32 to vector<8x128xf32>
      %53 = arith.maximumf %51, %52 : vector<8x128xf32>
      %c0_31 = arith.constant 0 : index
      %c0_32 = arith.constant 0 : index
      %54 = vector.load %arg10[%c0_31, %c0_32] : memref<8x128xf32, #tpu.memory_space<vmem>>, vector<8x128xf32>
      tpu.vector_store %arg10[%c0_31, %c0_32], %53 {strides = array<i32>} : memref<8x128xf32, #tpu.memory_space<vmem>>, vector<8x128xf32>,
    } else {
    }
    %c0 = arith.constant 0 : index
    %c0_1 = arith.constant 0 : index
    %3 = vector.load %arg7[%c0, %c0_1] : memref<128x128xbf16, #tpu.memory_space<vmem>>, vector<128x128xbf16>
    %c0_2 = arith.constant 0 : index
    %c0_3 = arith.constant 0 : index
    %4 = vector.load %arg8[%c0_2, %c0_3] : memref<1x128xf32, #tpu.memory_space<vmem>>, vector<1x128xf32>
    %c0_4 = arith.constant 0 : index
    %c0_5 = arith.constant 0 : index
    %5 = vector.load %arg10[%c0_4, %c0_5] : memref<8x128xf32, #tpu.memory_space<vmem>>, vector<8x128xf32>
    %6 = arith.truncf %5 : vector<8x128xf32> to vector<8x128xbf16>
    %cst = arith.constant dense<0.000000e+00> : vector<8x128xf32>
    %7 = tpu.matmul %6, %3, %cst {dimension_numbers = #tpu.dot_dimension_numbers<[1], [0], [0], [1], [0, 0, 1, 1], [], []>} : vector<8x128xbf16>, vector<128x128xbf16>, vector<8x128xf32> -> vector<8x128xf32>
    %8 = vector.broadcast %4 : vector<1x128xf32> to vector<8x128xf32>
    %9 = arith.addf %7, %8 : vector<8x128xf32>
    %c0_6 = arith.constant 0 : index
    %c0_7 = arith.constant 0 : index
    %10 = vector.load %arg9[%c0_6, %c0_7] : memref<8x128xf32, #tpu.memory_space<vmem>>, vector<8x128xf32>
    tpu.vector_store %arg9[%c0_6, %c0_7], %9 {strides = array<i32>} : memref<8x128xf32, #tpu.memory_space<vmem>>, vector<8x128xf32>,
    return
  }
  func.func @transform_0(%arg0: i32, %arg1: i32) -> (i32, i32) {
    %c0_i32 = arith.constant 0 : i32
    %c0_i32_0 = arith.constant 0 : i32
    return %arg0, %c0_i32 : i32, i32
  }
  func.func @transform_1(%arg0: i32, %arg1: i32) -> (i32, i32) {
    %c0_i32 = arith.constant 0 : i32
    %c0_i32_0 = arith.constant 0 : i32
    %c0_i32_1 = arith.constant 0 : i32
    return %c0_i32, %c0_i32_0 : i32, i32
  }
  func.func @transform_2(%arg0: i32, %arg1: i32) -> (i32, i32) {
    %c0_i32 = arith.constant 0 : i32
    %c0_i32_0 = arith.constant 0 : i32
    %c0_i32_1 = arith.constant 0 : i32
    return %c0_i32, %c0_i32_0 : i32, i32
  }
  func.func @transform_3(%arg0: i32, %arg1: i32) -> (i32, i32) {
    %c0_i32 = arith.constant 0 : i32
    %c0_i32_0 = arith.constant 0 : i32
    %c0_i32_1 = arith.constant 0 : i32
    return %c0_i32, %c0_i32_0 : i32, i32
  }
  func.func @transform_4(%arg0: i32, %arg1: i32) -> (i32, i32) {
    %c0_i32 = arith.constant 0 : i32
    %c0_i32_0 = arith.constant 0 : i32
    %c0_i32_1 = arith.constant 0 : i32
    return %c0_i32, %c0_i32_0 : i32, i32
  }
  func.func @transform_5(%arg0: i32, %arg1: i32) -> (i32, i32) {
    %c0_i32 = arith.constant 0 : i32
    %c0_i32_0 = arith.constant 0 : i32
    return %c0_i32, %arg1 : i32, i32
  }
  func.func @transform_6(%arg0: i32, %arg1: i32) -> (i32, i32) {
    %c0_i32 = arith.constant 0 : i32
    %c0_i32_0 = arith.constant 0 : i32
    return %c0_i32, %arg1 : i32, i32
  }
  func.func @transform_7(%arg0: i32, %arg1: i32) -> (i32, i32) {
    %c0_i32 = arith.constant 0 : i32
    return %arg0, %arg1 : i32, i32
  }
}

</mosaic_0001>

<llo_original>
// kernel: tpu_custom_call.1
$region0: #{tpu_custom_call.1}
  #allocation0 [shape = 'u32[]', space=smem, size = 0x4, offset = 0x4, fixed_abs, tag = 'smem constant byte address 0x4 - core index']
  #allocation1 [shape = 'u32[144,128]{1,0:T(1,128)}', space=vmem, size = 0x12000, scoped, tag = 'internal scratch']
  #allocation2 [shape = 'f32[8,128]{1,0:T(8,128)}', space=vmem, size = 0x1000, scoped, tag = 'scratch operand']
  %s0 = inlined_call_operand.hbm [shape: f32[8,16], index: 0, kind: input, shape index: {}]
  %s1 = inlined_call_operand.hbm [shape: bf16[16,128], index: 1, kind: input, shape index: {}]
  %s2 = inlined_call_operand.vmem [shape: f32[1,128], index: 2, kind: input, shape index: {}]
  %s3 = inlined_call_operand.hbm [shape: bf16[128,128], index: 3, kind: input, shape index: {}]
  %s4 = inlined_call_operand.vmem [shape: f32[1,128], index: 4, kind: input, shape index: {}]
  %s5 = inlined_call_operand.hbm [shape: bf16[128,128], index: 5, kind: input, shape index: {}]
  %s6 = inlined_call_operand.vmem [shape: f32[1,128], index: 6, kind: input, shape index: {}]
  %s7 = inlined_call_operand.hbm [shape: f32[8,128], index: 7, kind: output, shape index: {}]
  %s8 = sld [smem:[#allocation0]]
  $region58: #{tpu_custom_call.1} parent=0
    _
  %s10 = ssub.s32 1, %s8
  %s11 = scalar_select 0, %s10, %s8
  $region1: #{tpu_custom_call.1} parent=0
    #allocation3 [shape = 'u8[4096]{0}', space=vmem, size = 0x1000, scoped, tag = 'input window, operand 0, single buffered']
    #allocation4 [shape = 's32[1]{0}', space=sflag, size = 0x4, scoped, tag = 'scoped memory for tpu_custom_call.1']
    #allocation5 [shape = 's32[1]{0}', space=sflag, size = 0x4, scoped, tag = 'scoped memory for tpu_custom_call.1']
    #allocation6 [shape = 'u8[4096]{0}', space=vmem, size = 0x1000, scoped, tag = 'input window, operand 1, single buffered']
    #allocation7 [shape = 's32[1]{0}', space=sflag, size = 0x4, scoped, tag = 'scoped memory for tpu_custom_call.1']
    #allocation8 [shape = 'u8[32768]{0}', space=vmem, size = 0x8000, scoped, tag = 'input window, operand 3, single buffered']
    #allocation9 [shape = 'u8[32768]{0}', space=vmem, size = 0x8000, scoped, tag = 'input window, operand 5, single buffered']
    #allocation10 [shape = 's32[1]{0}', space=sflag, size = 0x4, scoped, tag = 'scoped memory for tpu_custom_call.1']
    #allocation11 [shape = 'u8[4096]{0}', space=vmem, size = 0x1000, scoped, tag = 'output window, operand 0, single buffered']
    %12 = vsyncpa [#allocation4], 0
    %13 = vsyncpa [#allocation7], 0
    %14 = vsyncpa [#allocation10], 0
    %15 = vsyncpa [#allocation5], 0
    // Predicated region
    $region2: #{tpu_custom_call.1} parent=1 // pred_check
      _
    $region3: #{tpu_custom_call.1} parent=1 // pred_check_branch
      %17 = sbr.rel (0) target = $region5
    $region4: #{tpu_custom_call.1} parent=1 // pred_region
      %s19 = ssub.s32 128, 128
      %20 = vsyncadd [#allocation4], %s19
      %s22 = sshll.u32 [#allocation3], 4
      %s23 = int_to_ptr.vmem [resolvable:$true] %s22
      %25 = dma.hbm_to_vmem [thread:$0]  %s0, 128, %s23, [#allocation4]
    $region5: #{tpu_custom_call.1} parent=1 // pred_fallthru
      _
    // Predicated region
    $region6: #{tpu_custom_call.1} parent=1 // pred_check
      _
    $region7: #{tpu_custom_call.1} parent=1 // pred_check_branch
      %27 = sbr.rel (0) target = $region9
    $region8: #{tpu_custom_call.1} parent=1 // pred_region
      %s29 = ssub.s32 128, 128
      %30 = vsyncadd [#allocation7], %s29
      %s31 = sshll.u32 [#allocation6], 4
      %s32 = int_to_ptr.vmem [resolvable:$true] %s31
      %37 = dma.hbm_to_vmem [thread:$0]  %s1, 128, %s32, [#allocation7], 64, 64, 4
    $region9: #{tpu_custom_call.1} parent=1 // pred_fallthru
      _
    // Predicated region
    $region10: #{tpu_custom_call.1} parent=1 // pred_check
      _
    $region11: #{tpu_custom_call.1} parent=1 // pred_check_branch
      %39 = sbr.rel (0) target = $region13
    $region12: #{tpu_custom_call.1} parent=1 // pred_region
      _
    $region13: #{tpu_custom_call.1} parent=1 // pred_fallthru
      _
    // Predicated region
    $region14: #{tpu_custom_call.1} parent=1 // pred_check
      _
    $region15: #{tpu_custom_call.1} parent=1 // pred_check_branch
      %41 = sbr.rel (0) target = $region17
    $region16: #{tpu_custom_call.1} parent=1 // pred_region
      %s43 = ssub.s32 1024, 1024
      %44 = vsyncadd [#allocation7], %s43
      %s45 = sshll.u32 [#allocation8], 4
      %s46 = int_to_ptr.vmem [resolvable:$true] %s45
      %51 = dma.hbm_to_vmem [thread:$0]  %s3, 1024, %s46, [#allocation7], 64, 64, 4
    $region17: #{tpu_custom_call.1} parent=1 // pred_fallthru
      _
    // Predicated region
    $region18: #{tpu_custom_call.1} parent=1 // pred_check
      _
    $region19: #{tpu_custom_call.1} parent=1 // pred_check_branch
      %53 = sbr.rel (0) target = $region21
    $region20: #{tpu_custom_call.1} parent=1 // pred_region
      _
    $region21: #{tpu_custom_call.1} parent=1 // pred_fallthru
      _
    // Predicated region
    $region22: #{tpu_custom_call.1} parent=1 // pred_check
      _
    $region23: #{tpu_custom_call.1} parent=1 // pred_check_branch
      %55 = sbr.rel (0) target = $region25
    $region24: #{tpu_custom_call.1} parent=1 // pred_region
      %s57 = ssub.s32 1024, 1024
      %58 = vsyncadd [#allocation10], %s57
      %s59 = sshll.u32 [#allocation9], 4
      %s60 = int_to_ptr.vmem [resolvable:$true] %s59
      %65 = dma.hbm_to_vmem [thread:$0]  %s5, 1024, %s60, [#allocation10], 64, 64, 4
    $region25: #{tpu_custom_call.1} parent=1 // pred_fallthru
      _
    // Predicated region
    $region26: #{tpu_custom_call.1} parent=1 // pred_check
      _
    $region27: #{tpu_custom_call.1} parent=1 // pred_check_branch
      %67 = sbr.rel (0) target = $region29
    $region28: #{tpu_custom_call.1} parent=1 // pred_region
      _
    $region29: #{tpu_custom_call.1} parent=1 // pred_fallthru
      _
    // Predicated region
    $region30: #{tpu_custom_call.1} parent=1 // pred_check
      _
    $region31: #{tpu_custom_call.1} parent=1 // pred_check_branch
      %69 = sbr.rel (0) target = $region33
    $region32: #{tpu_custom_call.1} parent=1 // pred_region
      %70 = dma.done [#allocation4], 128
    $region33: #{tpu_custom_call.1} parent=1 // pred_fallthru
      _
    // Predicated region
    $region34: #{tpu_custom_call.1} parent=1 // pred_check
      _
    $region35: #{tpu_custom_call.1} parent=1 // pred_check_branch
      %72 = sbr.rel (0) target = $region37
    $region36: #{tpu_custom_call.1} parent=1 // pred_region
      %73 = dma.done [#allocation7], 128
    $region37: #{tpu_custom_call.1} parent=1 // pred_fallthru
      _
    // Predicated region
    $region38: #{tpu_custom_call.1} parent=1 // pred_check
      _
    $region39: #{tpu_custom_call.1} parent=1 // pred_check_branch
      %75 = sbr.rel (0) target = $region41
    $region40: #{tpu_custom_call.1} parent=1 // pred_region
      %76 = dma.done [#allocation7], 1024
    $region41: #{tpu_custom_call.1} parent=1 // pred_fallthru
      _
    // Predicated region
    $region42: #{tpu_custom_call.1} parent=1 // pred_check
      _
    $region43: #{tpu_custom_call.1} parent=1 // pred_check_branch
      %78 = sbr.rel (0) target = $region45
    $region44: #{tpu_custom_call.1} parent=1 // pred_region
      %79 = dma.done [#allocation10], 1024
    $region45: #{tpu_custom_call.1} parent=1 // pred_fallthru
      _
    %p81 = scmp.eq.s32.totalorder 0, 0
    // Predicated region
    $region46: #{tpu_custom_call.1} parent=1 // pred_check
      %p82 = pneg %p81
    $region47: #{tpu_custom_call.1} parent=1 // pred_check_branch
      %84 = sbr.rel (%p82) target = $region49
    $region48: #{tpu_custom_call.1} parent=1 // pred_region
      %v85 = vld [vmem:[#allocation3] sm:$0xff]
      %v86 = vmul.f32 %v85, %v85
      %vm87 = vcmask 130048
      %v88 = vsel %vm87, %v86, 0.0
      %89 = vadd.xlane.f32.xlu0 %v88
      %v90 = vpop.xlane.xlu0 %89
      %v91 = vmax.f32 %v90, 1e-15
      %v92 = vrsqrt.pop %v91
      %v93 = vmul.f32 %v91, %v92
      %vm94 = vcmp.eq.f32.partialorder %v91, inf
      %v95 = vsel %vm94, %v91, %v93
      %vm96 = vcmp.eq.f32.partialorder %v91, 0.0
      %v97 = vand.u32 %v91, 2147483648
      %v98 = vsel %vm96, %v97, %v95
      %v99 = vmax.f32 %v98, 1e-15
      %v100 = vmin.f32 %v99, 0.99999
      %v101 = vadd.f32 %v100, 1.0
      %v102 = vsub.f32 1.0, %v100
      %v103 = vrcp.pop %v102
      %v104 = vmul.f32 %v101, %v103
      %v105 = vlog2.pop %v104
      %v106 = vmul.f32 %v105, 0.6931472
      %v107 = vmul.f32 %v106, 0.5
      %v108 = vrcp.pop %v98
      %v109 = vmul.f32 %v107, %v108
      %v110 = vmul.f32 %v85, %v109
      %v111 = vld [vmem:[#allocation6] sm:$0xf]
      %v112 = vld [vmem:[#allocation6 + $0x4] sm:$0xf]
      %v113 = vld [vmem:[%s2] sm:$0x1]
      %v114 = vpack.c.bf16 %v110, %v110
      %v116 = vlaneseq
      %v117 = vshrl.u32 %v116, 7
      %v118 = vsub.s32 0, %v117
      %v119 = vrot.slane %v113, %v118
      %v123 = vunpack.c.l.b16 %v111
      %v124 = vunpack.c.l.b16 %v112
      %v125 = vpack.c.b16 %v124, %v123
      %v128 = vsel %vm87, %v114, 0
      %130 = vmatprep.subr.bf16.mxu0 0
      %131 = vmatpush1.bf16.msra.mxu0 %v125
      %132 = vmatprep.subr.bf16.mxu0 0
      %133 = vmatpush1.bf16.msra.mxu0 0
      %134 = vmatprep.subr.bf16.mxu0 0
      %135 = vmatpush1.bf16.msra.mxu0 0
      %136 = vmatprep.subr.bf16.mxu0 0
      %137 = vmatpush1.bf16.msra.mxu0 0
      %138 = vmatprep.subr.bf16.mxu0 0
      %139 = vmatpush1.bf16.msra.mxu0 0
      %140 = vmatprep.subr.bf16.mxu0 0
      %141 = vmatpush1.bf16.msra.mxu0 0
      %142 = vmatprep.subr.bf16.mxu0 0
      %143 = vmatpush1.bf16.msra.mxu0 0
      %144 = vmatprep.subr.bf16.mxu0 0
      %145 = vmatpush1.bf16.msra.mxu0 0
      %146 = vmatprep.subr.bf16.mxu0 0
      %147 = vmatpush1.bf16.msra.mxu0 0
      %148 = vmatprep.subr.bf16.mxu0 0
      %149 = vmatpush1.bf16.msra.mxu0 0
      %150 = vmatprep.subr.bf16.mxu0 0
      %151 = vmatpush1.bf16.msra.mxu0 0
      %152 = vmatprep.subr.bf16.mxu0 0
      %153 = vmatpush1.bf16.msra.mxu0 0
      %154 = vmatprep.subr.bf16.mxu0 0
      %155 = vmatpush1.bf16.msra.mxu0 0
      %156 = vmatprep.subr.bf16.mxu0 0
      %157 = vmatpush1.bf16.msra.mxu0 0
      %158 = vmatprep.subr.bf16.mxu0 0
      %159 = vmatpush1.bf16.msra.mxu0 0
      %160 = vmatprep.subr.bf16.mxu0 0
      %161 = vmatpush1.bf16.msra.mxu0 0
      %162 = vmatprep.mubr.bf16.mxu0 0
      %163 = vmatmul.mubr.bf16.gmra.mrb[0].mxu0 %v128
      %v164 = vpop.f32.mrb[0].mxu0
      %v165 = vadd.f32 %v119, %v164
      %v166 = vpop.f32.mrb[0].mxu0
      %v167 = vpop.f32.mrb[0].mxu0
      %v168 = vpop.f32.mrb[0].mxu0
      %169 = vdwg.mxu0
      %v170 = vmax.f32 %v165, 0.0
      %v171 = vld [vmem:[#allocation8] sm:$0xf]
      %v172 = vld [vmem:[#allocation8 + $0x4] sm:$0xf]
      %v173 = vld [vmem:[#allocation8 + $0x8] sm:$0xf]
      %v174 = vld [vmem:[#allocation8 + $0xc] sm:$0xf]
      %v175 = vld [vmem:[#allocation8 + $0x10] sm:$0xf]
      %v176 = vld [vmem:[#allocation8 + $0x14] sm:$0xf]
      %v177 = vld [vmem:[#allocation8 + $0x18] sm:$0xf]
      %v178 = vld [vmem:[#allocation8 + $0x1c] sm:$0xf]
      %v179 = vld [vmem:[#allocation8 + $0x20] sm:$0xf]
      %v180 = vld [vmem:[#allocation8 + $0x24] sm:$0xf]
      %v181 = vld [vmem:[#allocation8 + $0x28] sm:$0xf]
      %v182 = vld [vmem:[#allocation8 + $0x2c] sm:$0xf]
      %v183 = vld [vmem:[#allocation8 + $0x30] sm:$0xf]
      %v184 = vld [vmem:[#allocation8 + $0x34] sm:$0xf]
      %v185 = vld [vmem:[#allocation8 + $0x38] sm:$0xf]
      %v186 = vld [vmem:[#allocation8 + $0x3c] sm:$0xf]
      %v187 = vld [vmem:[%s4] sm:$0x1]
      %v188 = vpack.c.bf16 %v170, %v170
      %v190 = vlaneseq
      %v191 = vshrl.u32 %v190, 7
      %v192 = vsub.s32 0, %v191
      %v193 = vrot.slane %v187, %v192
      %v211 = vunpack.c.l.b16 %v171
      %v212 = vunpack.c.l.b16 %v172
      %v213 = vunpack.c.l.b16 %v173
      %v214 = vunpack.c.l.b16 %v174
      %v215 = vunpack.c.l.b16 %v175
      %v216 = vunpack.c.l.b16 %v176
      %v217 = vunpack.c.l.b16 %v177
      %v218 = vunpack.c.l.b16 %v178
      %v219 = vunpack.c.l.b16 %v179
      %v220 = vunpack.c.l.b16 %v180
      %v221 = vunpack.c.l.b16 %v181
      %v222 = vunpack.c.l.b16 %v182
      %v223 = vunpack.c.l.b16 %v183
      %v224 = vunpack.c.l.b16 %v184
      %v225 = vunpack.c.l.b16 %v185
      %v226 = vunpack.c.l.b16 %v186
      %v227 = vpack.c.b16 %v212, %v211
      %v228 = vpack.c.b16 %v214, %v213
      %v229 = vpack.c.b16 %v216, %v215
      %v230 = vpack.c.b16 %v218, %v217
      %v231 = vpack.c.b16 %v220, %v219
      %v232 = vpack.c.b16 %v222, %v221
      %v233 = vpack.c.b16 %v224, %v223
      %v234 = vpack.c.b16 %v226, %v225
      %243 = vmatprep.subr.bf16.mxu0 0
      %244 = vmatpush1.bf16.msra.mxu0 %v227
      %245 = vmatprep.subr.bf16.mxu0 0
      %246 = vmatpush1.bf16.msra.mxu0 %v228
      %247 = vmatprep.subr.bf16.mxu0 0
      %248 = vmatpush1.bf16.msra.mxu0 %v229
      %249 = vmatprep.subr.bf16.mxu0 0
      %250 = vmatpush1.bf16.msra.mxu0 %v230
      %251 = vmatprep.subr.bf16.mxu0 0
      %252 = vmatpush1.bf16.msra.mxu0 %v231
      %253 = vmatprep.subr.bf16.mxu0 0
      %254 = vmatpush1.bf16.msra.mxu0 %v232
      %255 = vmatprep.subr.bf16.mxu0 0
      %256 = vmatpush1.bf16.msra.mxu0 %v233
      %257 = vmatprep.subr.bf16.mxu0 0
      %258 = vmatpush1.bf16.msra.mxu0 %v234
      %259 = vmatprep.subr.bf16.mxu0 0
      %260 = vmatpush1.bf16.msra.mxu0 0
      %261 = vmatprep.subr.bf16.mxu0 0
      %262 = vmatpush1.bf16.msra.mxu0 0
      %263 = vmatprep.subr.bf16.mxu0 0
      %264 = vmatpush1.bf16.msra.mxu0 0
      %265 = vmatprep.subr.bf16.mxu0 0
      %266 = vmatpush1.bf16.msra.mxu0 0
      %267 = vmatprep.subr.bf16.mxu0 0
      %268 = vmatpush1.bf16.msra.mxu0 0
      %269 = vmatprep.subr.bf16.mxu0 0
      %270 = vmatpush1.bf16.msra.mxu0 0
      %271 = vmatprep.subr.bf16.mxu0 0
      %272 = vmatpush1.bf16.msra.mxu0 0
      %273 = vmatprep.subr.bf16.mxu0 0
      %274 = vmatpush1.bf16.msra.mxu0 0
      %275 = vmatprep.mubr.bf16.mxu0 0
      %276 = vmatmul.mubr.bf16.gmra.mrb[0].mxu0 %v188
      %v277 = vpop.f32.mrb[0].mxu0
      %v278 = vadd.f32 %v193, %v277
      %v279 = vpop.f32.mrb[0].mxu0
      %v280 = vpop.f32.mrb[0].mxu0
      %v281 = vpop.f32.mrb[0].mxu0
      %282 = vdwg.mxu0
      %v283 = vmax.f32 %v278, 0.0
      %284 = vst [vmem:[#allocation2] sm:$0xff] %v283
    $region49: #{tpu_custom_call.1} parent=1 // pred_fallthru
      _
    %v285 = vld [vmem:[#allocation9] sm:$0xf]
    %v286 = vld [vmem:[#allocation9 + $0x4] sm:$0xf]
    %v287 = vld [vmem:[#allocation9 + $0x8] sm:$0xf]
    %v288 = vld [vmem:[#allocation9 + $0xc] sm:$0xf]
    %v289 = vld [vmem:[#allocation9 + $0x10] sm:$0xf]
    %v290 = vld [vmem:[#allocation9 + $0x14] sm:$0xf]
    %v291 = vld [vmem:[#allocation9 + $0x18] sm:$0xf]
    %v292 = vld [vmem:[#allocation9 + $0x1c] sm:$0xf]
    %v293 = vld [vmem:[#allocation9 + $0x20] sm:$0xf]
    %v294 = vld [vmem:[#allocation9 + $0x24] sm:$0xf]
    %v295 = vld [vmem:[#allocation9 + $0x28] sm:$0xf]
    %v296 = vld [vmem:[#allocation9 + $0x2c] sm:$0xf]
    %v297 = vld [vmem:[#allocation9 + $0x30] sm:$0xf]
    %v298 = vld [vmem:[#allocation9 + $0x34] sm:$0xf]
    %v299 = vld [vmem:[#allocation9 + $0x38] sm:$0xf]
    %v300 = vld [vmem:[#allocation9 + $0x3c] sm:$0xf]
    %v301 = vld [vmem:[%s6] sm:$0x1]
    %v302 = vld [vmem:[#allocation2] sm:$0xff]
    %v303 = vpack.c.bf16 %v302, %v302
    %v305 = vlaneseq
    %v306 = vshrl.u32 %v305, 7
    %v307 = vsub.s32 0, %v306
    %v308 = vrot.slane %v301, %v307
    %v326 = vunpack.c.l.b16 %v285
    %v327 = vunpack.c.l.b16 %v286
    %v328 = vunpack.c.l.b16 %v287
    %v329 = vunpack.c.l.b16 %v288
    %v330 = vunpack.c.l.b16 %v289
    %v331 = vunpack.c.l.b16 %v290
    %v332 = vunpack.c.l.b16 %v291
    %v333 = vunpack.c.l.b16 %v292
    %v334 = vunpack.c.l.b16 %v293
    %v335 = vunpack.c.l.b16 %v294
    %v336 = vunpack.c.l.b16 %v295
    %v337 = vunpack.c.l.b16 %v296
    %v338 = vunpack.c.l.b16 %v297
    %v339 = vunpack.c.l.b16 %v298
    %v340 = vunpack.c.l.b16 %v299
    %v341 = vunpack.c.l.b16 %v300
    %v342 = vpack.c.b16 %v327, %v326
    %v343 = vpack.c.b16 %v329, %v328
    %v344 = vpack.c.b16 %v331, %v330
    %v345 = vpack.c.b16 %v333, %v332
    %v346 = vpack.c.b16 %v335, %v334
    %v347 = vpack.c.b16 %v337, %v336
    %v348 = vpack.c.b16 %v339, %v338
    %v349 = vpack.c.b16 %v341, %v340
    %358 = vmatprep.subr.bf16.mxu0 0
    %359 = vmatpush1.bf16.msra.mxu0 %v342
    %360 = vmatprep.subr.bf16.mxu0 0
    %361 = vmatpush1.bf16.msra.mxu0 %v343
    %362 = vmatprep.subr.bf16.mxu0 0
    %363 = vmatpush1.bf16.msra.mxu0 %v344
    %364 = vmatprep.subr.bf16.mxu0 0
    %365 = vmatpush1.bf16.msra.mxu0 %v345
    %366 = vmatprep.subr.bf16.mxu0 0
    %367 = vmatpush1.bf16.msra.mxu0 %v346
    %368 = vmatprep.subr.bf16.mxu0 0
    %369 = vmatpush1.bf16.msra.mxu0 %v347
    %370 = vmatprep.subr.bf16.mxu0 0
    %371 = vmatpush1.bf16.msra.mxu0 %v348
    %372 = vmatprep.subr.bf16.mxu0 0
    %373 = vmatpush1.bf16.msra.mxu0 %v349
    %374 = vmatprep.subr.bf16.mxu0 0
    %375 = vmatpush1.bf16.msra.mxu0 0
    %376 = vmatprep.subr.bf16.mxu0 0
    %377 = vmatpush1.bf16.msra.mxu0 0
    %378 = vmatprep.subr.bf16.mxu0 0
    %379 = vmatpush1.bf16.msra.mxu0 0
    %380 = vmatprep.subr.bf16.mxu0 0
    %381 = vmatpush1.bf16.msra.mxu0 0
    %382 = vmatprep.subr.bf16.mxu0 0
    %383 = vmatpush1.bf16.msra.mxu0 0
    %384 = vmatprep.subr.bf16.mxu0 0
    %385 = vmatpush1.bf16.msra.mxu0 0
    %386 = vmatprep.subr.bf16.mxu0 0
    %387 = vmatpush1.bf16.msra.mxu0 0
    %388 = vmatprep.subr.bf16.mxu0 0
    %389 = vmatpush1.bf16.msra.mxu0 0
    %390 = vmatprep.mubr.bf16.mxu0 0
    %391 = vmatmul.mubr.bf16.gmra.mrb[0].mxu0 %v303
    %v392 = vpop.f32.mrb[0].mxu0
    %v393 = vadd.f32 %v308, %v392
    %v394 = vpop.f32.mrb[0].mxu0
    %v395 = vpop.f32.mrb[0].mxu0
    %v396 = vpop.f32.mrb[0].mxu0
    %397 = vdwg.mxu0
    %398 = vst [vmem:[#allocation11] sm:$0xff] %v393
    // Predicated region
    $region50: #{tpu_custom_call.1} parent=1 // pred_check
      _
    $region51: #{tpu_custom_call.1} parent=1 // pred_check_branch
      %400 = sbr.rel (0) target = $region53
    $region52: #{tpu_custom_call.1} parent=1 // pred_region
      %s402 = ssub.s32 128, 128
      %403 = vsyncadd [#allocation5], %s402
      %s405 = sshll.u32 [#allocation11], 4
      %s406 = int_to_ptr.vmem [resolvable:$true] %s405
      %408 = dma.vmem_to_hbm [thread:$0]  %s406, 128, %s7, [#allocation5]
    $region53: #{tpu_custom_call.1} parent=1 // pred_fallthru
      _
    // Predicated region
    $region54: #{tpu_custom_call.1} parent=1 // pred_check
      _
    $region55: #{tpu_custom_call.1} parent=1 // pred_check_branch
      %410 = sbr.rel (0) target = $region57
    $region56: #{tpu_custom_call.1} parent=1 // pred_region
      %411 = dma.done [#allocation5], 128
    $region57: #{tpu_custom_call.1} parent=1 // pred_fallthru
      _
    %412 = vsyncpa [#allocation4], 1
    %413 = vsyncpa [#allocation7], 1
    %414 = vsyncpa [#allocation10], 1
    %415 = vsyncpa [#allocation5], 1

</llo_original>
